<compile_context>
chip_gen: v7x
topology: tpu7x:2x2x1
jax: 0.10.0
libtpu: 0.0.40
codegen_flags: <defaults>
</compile_context>

<pallas_src>
from contextlib import contextmanager
from typing import NamedTuple, Union

import jax
import jax.numpy as jnp
from jax import lax
from jax.experimental import pallas as pl
from jax.experimental.pallas import tpu as pltpu


# ----------------------------- Pallas kernel -----------------------------

def _gaussian_head_kernel(x_ref, w_ref, b_ref, out_ref):
    # x_ref:   (TB, H)        bf16
    # w_ref:   (H, 2*Apad)    bf16   (mu columns | log_std columns)
    # b_ref:   (1, 2*Apad)    f32
    # out_ref: (TB, 2*Apad)   f32    (mu | std)
    acc = jnp.dot(x_ref[...], w_ref[...],
                  preferred_element_type=jnp.float32)      # MXU, f32 accumulate
    acc = acc + b_ref[...]                                  # broadcast bias add
    apad = acc.shape[-1] // 2
    lane = lax.broadcasted_iota(jnp.int32, acc.shape, dimension=1)
    # First Apad lanes stay as mu; last Apad lanes become std = exp(log_std).
    # exp goes to the EUP slot; the select is a cheap VPU op.  Single fused,
    # lane-dense 2*Apad-wide store.
    out_ref[...] = jnp.where(lane < apad, acc, jnp.exp(acc)).astype(out_ref.dtype)


def gaussian_head_pallas(x, w_mu, b_mu, w_ls, b_ls, *, block_b=512):
    """Computes (mean, std) of a diagonal Gaussian head in one Pallas kernel."""
    B, H = x.shape
    A = w_mu.shape[1]

    # --- pad action dim to a lane-dense multiple of 128 and fuse the heads ---
    Apad = max(128, ((A + 127) // 128) * 128)
    w = jnp.zeros((H, 2 * Apad), jnp.float32)
    w = w.at[:, :A].set(w_mu).at[:, Apad:Apad + A].set(w_ls)
    b = jnp.zeros((1, 2 * Apad), jnp.float32)
    b = b.at[:, :A].set(b_mu.reshape(1, A)).at[:, Apad:Apad + A].set(
        b_ls.reshape(1, A))

    # --- pad batch to a multiple of the batch tile (>= 8 sublanes) ---
    TB = min(block_b, max(8, ((B + 7) // 8) * 8))
    TB = max(8, (TB // 8) * 8)
    Bp = ((B + TB - 1) // TB) * TB
    xp = x if Bp == B else jnp.pad(x, ((0, Bp - B), (0, 0)))

    # bf16 matmul inputs (f32 accumulation inside the kernel).
    xb = xp.astype(jnp.bfloat16)
    wb = w.astype(jnp.bfloat16)

    grid = (Bp // TB,)
    out = pl.pallas_call(
        _gaussian_head_kernel,
        out_shape=jax.ShapeDtypeStruct((Bp, 2 * Apad), jnp.float32),
        grid=grid,
        in_specs=[
            pl.BlockSpec((TB, H), lambda i: (i, 0)),          # x: tiled over batch
            pl.BlockSpec((H, 2 * Apad), lambda i: (0, 0)),    # fused weight: resident
            pl.BlockSpec((1, 2 * Apad), lambda i: (0, 0)),    # fused bias: resident
        ],
        out_specs=pl.BlockSpec((TB, 2 * Apad), lambda i: (i, 0)),
        compiler_params=pltpu.CompilerParams(
            dimension_semantics=("parallel",)),
    )(xb, wb, b)

    mu = out[:B, :A]
    std = out[:B, Apad:Apad + A]
    return mu, std


# ------------------------ Distribution (return type) ---------------------

class DiagNormal(NamedTuple):
    """Minimal stand-in for torch.distributions.Normal (diagonal)."""
    loc: jnp.ndarray
    scale: jnp.ndarray

    def sample(self, key):
        return self.loc + self.scale * jax.random.normal(key, self.loc.shape)

    def log_prob(self, value):
        var = self.scale ** 2
        return -0.5 * (((value - self.loc) ** 2) / var
                       + jnp.log(2.0 * jnp.pi * var))


# ----------------------- StochasticHeadBase (JAX port) -------------------

class StochasticHeadBase:
    """Abstract dispatcher reproducing the PyTorch base-class semantics."""

    def __init__(self):
        self.is_stochastic = True

    def forward_stochastic(self, *args, **kwargs):
        raise NotImplementedError()

    def forward_determistic(self, *args, **kwargs):
        raise NotImplementedError()

    def forward(self, *args, **kwargs) -> Union[jnp.ndarray, DiagNormal]:
        if self.is_stochastic:
            return self.forward_stochastic(*args, **kwargs)
        else:
            return self.forward_determistic(*args, **kwargs)

    __call__ = forward

    @contextmanager
    def deterministic(self):
        try:
            pre_state = self.is_stochastic
            self.is_stochastic = False
            yield self
        finally:
            self.is_stochastic = pre_state

    @contextmanager
    def stochastic(self):
        try:
            pre_state = self.is_stochastic
            # NOTE: the reference PyTorch code also sets False here (verbatim).
            self.is_stochastic = False
            yield self
        finally:
            self.is_stochastic = pre_state


class GaussianHead(StochasticHeadBase):
    """Concrete head: linear->mean, linear->log_std, std=exp(log_std)."""

    def __init__(self, hidden: int, action_dim: int, key):
        super().__init__()
        k1, k2, k3, k4 = jax.random.split(key, 4)
        scale = 1.0 / jnp.sqrt(hidden)
        self.w_mu = (jax.random.normal(k1, (hidden, action_dim)) * scale
                     ).astype(jnp.float32)
        self.b_mu = (jax.random.normal(k2, (1, action_dim)) * 0.01
                     ).astype(jnp.float32)
        self.w_ls = (jax.random.normal(k3, (hidden, action_dim)) * scale
                     ).astype(jnp.float32)
        self.b_ls = (jax.random.normal(k4, (1, action_dim)) * 0.01
                     ).astype(jnp.float32)

    def _params(self, x):
        return gaussian_head_pallas(x, self.w_mu, self.b_mu,
                                    self.w_ls, self.b_ls)

    def forward_stochastic(self, x) -> DiagNormal:
        mu, std = self._params(x)
        return DiagNormal(loc=mu, scale=std)

    def forward_determistic(self, x) -> jnp.ndarray:
        mu, _ = self._params(x)
        return mu


# --------------------------------- main ----------------------------------

if __name__ == "__main__":
    key = jax.random.PRNGKey(0)
    k_param, k_x, k_sample = jax.random.split(key, 3)

    B, H, A = 2, 32, 8
    head = GaussianHead(hidden=H, action_dim=A, key=k_param)
    x = jax.random.normal(k_x, (B, H), dtype=jnp.float32)

    # Stochastic path (default): returns a distribution (loc, scale).
    dist = head(x)
    jax.block_until_ready(dist.loc)
    jax.block_until_ready(dist.scale)

    # Deterministic path via the context manager: returns the mean tensor.
    with head.deterministic():
        mean = head(x)
    jax.block_until_ready(mean)

    # Reference check in plain JAX on the bf16-rounded matmul inputs
    # (the kernel casts x / weights to bf16, accumulates in f32).
    xb = x.astype(jnp.bfloat16).astype(jnp.float32)
    wmu = head.w_mu.astype(jnp.bfloat16).astype(jnp.float32)
    wls = head.w_ls.astype(jnp.bfloat16).astype(jnp.float32)
    ref_mu = xb @ wmu + head.b_mu
    ref_std = jnp.exp(xb @ wls + head.b_ls)

    assert dist.loc.shape == (B, A) and dist.scale.shape == (B, A)
    assert mean.shape == (B, A)
    assert jnp.allclose(dist.loc, ref_mu, atol=2e-3, rtol=2e-3)
    assert jnp.allclose(dist.scale, ref_std, atol=2e-3, rtol=2e-3)
    assert jnp.allclose(mean, ref_mu, atol=2e-3, rtol=2e-3)

    print("KERNEL_OK")
</pallas_src>

<mosaic_0001>
module attributes {stable_mosaic.version = 11 : i64} {
  func.func @_gaussian_head_kernel(%arg0: i32, %arg1: memref<8x32xbf16, #tpu.memory_space<vmem>>, %arg2: memref<32x256xbf16, #tpu.memory_space<vmem>>, %arg3: memref<1x256xf32, #tpu.memory_space<vmem>>, %arg4: memref<8x256xf32, #tpu.memory_space<vmem>>) attributes {dimension_semantics = [#tpu.dimension_semantics<parallel>], iteration_bounds = array<i64: 1>, scalar_prefetch = 0 : i64, scratch_operands = 0 : i64, tpu.core_type = #tpu.core_type<tc>, window_params = [{transform_indices = @transform_0, window_bounds = array<i64: 8, 32>}, {pipeline_mode = #tpu.pipeline_mode<synchronous>, transform_indices = @transform_1, window_bounds = array<i64: 32, 256>}, {pipeline_mode = #tpu.pipeline_mode<synchronous>, transform_indices = @transform_2, window_bounds = array<i64: 1, 256>}, {transform_indices = @transform_3, window_bounds = array<i64: 8, 256>}]} {
    %c0 = arith.constant 0 : index
    %c0_0 = arith.constant 0 : index
    %0 = vector.load %arg1[%c0, %c0_0] : memref<8x32xbf16, #tpu.memory_space<vmem>>, vector<8x32xbf16>
    %c0_1 = arith.constant 0 : index
    %c0_2 = arith.constant 0 : index
    %1 = vector.load %arg2[%c0_1, %c0_2] : memref<32x256xbf16, #tpu.memory_space<vmem>>, vector<32x256xbf16>
    %cst = arith.constant dense<0.000000e+00> : vector<8x256xf32>
    %2 = tpu.matmul %0, %1, %cst {dimension_numbers = #tpu.dot_dimension_numbers<[1], [0], [0], [1], [0, 0, 1, 1], [], []>} : vector<8x32xbf16>, vector<32x256xbf16>, vector<8x256xf32> -> vector<8x256xf32>
    %c0_3 = arith.constant 0 : index
    %c0_4 = arith.constant 0 : index
    %3 = vector.load %arg3[%c0_3, %c0_4] : memref<1x256xf32, #tpu.memory_space<vmem>>, vector<1x256xf32>
    %4 = vector.broadcast %3 : vector<1x256xf32> to vector<8x256xf32>
    %5 = arith.addf %2, %4 : vector<8x256xf32>
    %6 = tpu.iota {dimensions = array<i32: 1>} : vector<8x256xi32>
    %c128_i32 = arith.constant 128 : i32
    %7 = vector.broadcast %c128_i32 : i32 to vector<8x256xi32>
    %8 = arith.cmpi slt, %6, %7 : vector<8x256xi32>
    %9 = math.exp %5 : vector<8x256xf32>
    %10 = arith.select %8, %5, %9 : vector<8x256xi1>, vector<8x256xf32>
    %c0_5 = arith.constant 0 : index
    %c0_6 = arith.constant 0 : index
    %11 = vector.load %arg4[%c0_5, %c0_6] : memref<8x256xf32, #tpu.memory_space<vmem>>, vector<8x256xf32>
    tpu.vector_store %arg4[%c0_5, %c0_6], %10 {strides = array<i32>} : memref<8x256xf32, #tpu.memory_space<vmem>>, vector<8x256xf32>,
    return
  }
  func.func @transform_0(%arg0: i32) -> (i32, i32) {
    %c0_i32 = arith.constant 0 : i32
    %c0_i32_0 = arith.constant 0 : i32
    return %arg0, %c0_i32 : i32, i32
  }
  func.func @transform_1(%arg0: i32) -> (i32, i32) {
    %c0_i32 = arith.constant 0 : i32
    %c0_i32_0 = arith.constant 0 : i32
    %c0_i32_1 = arith.constant 0 : i32
    return %c0_i32, %c0_i32_0 : i32, i32
  }
  func.func @transform_2(%arg0: i32) -> (i32, i32) {
    %c0_i32 = arith.constant 0 : i32
    %c0_i32_0 = arith.constant 0 : i32
    %c0_i32_1 = arith.constant 0 : i32
    return %c0_i32, %c0_i32_0 : i32, i32
  }
  func.func @transform_3(%arg0: i32) -> (i32, i32) {
    %c0_i32 = arith.constant 0 : i32
    %c0_i32_0 = arith.constant 0 : i32
    return %arg0, %c0_i32 : i32, i32
  }
}

</mosaic_0001>

<llo_original>
// kernel: tpu_custom_call.1
$region0: #{tpu_custom_call.1}
  #allocation0 [shape = 'u32[]', space=smem, size = 0x4, offset = 0x4, fixed_abs, tag = 'smem constant byte address 0x4 - core index']
  #allocation1 [shape = 'u32[144,128]{1,0:T(1,128)}', space=vmem, size = 0x12000, scoped, tag = 'internal scratch']
  %s0 = inlined_call_operand.hbm [shape: bf16[8,32], index: 0, kind: input, shape index: {}]
  %s1 = inlined_call_operand.hbm [shape: bf16[32,256], index: 1, kind: input, shape index: {}]
  %s2 = inlined_call_operand.vmem [shape: f32[1,256], index: 2, kind: input, shape index: {}]
  %s3 = inlined_call_operand.hbm [shape: f32[8,256], index: 3, kind: output, shape index: {}]
  %s4 = sld [smem:[#allocation0]]
  $region30: #{tpu_custom_call.1} parent=0
    _
  %s6 = ssub.s32 1, %s4
  %s7 = scalar_select 0, %s6, %s4
  $region1: #{tpu_custom_call.1} parent=0
    #allocation2 [shape = 'u8[2048]{0}', space=vmem, size = 0x800, scoped, tag = 'input window, operand 0, single buffered']
    #allocation3 [shape = 's32[1]{0}', space=sflag, size = 0x4, scoped, tag = 'scoped memory for tpu_custom_call.1']
    #allocation4 [shape = 's32[1]{0}', space=sflag, size = 0x4, scoped, tag = 'scoped memory for tpu_custom_call.1']
    #allocation5 [shape = 'u8[16384]{0}', space=vmem, size = 0x4000, scoped, tag = 'input window, operand 1, single buffered']
    #allocation6 [shape = 's32[1]{0}', space=sflag, size = 0x4, scoped, tag = 'scoped memory for tpu_custom_call.1']
    #allocation7 [shape = 'u8[8192]{0}', space=vmem, size = 0x2000, scoped, tag = 'output window, operand 0, single buffered']
    %8 = vsyncpa [#allocation3], 0
    %9 = vsyncpa [#allocation6], 0
    %10 = vsyncpa [#allocation4], 0
    // Predicated region
    $region2: #{tpu_custom_call.1} parent=1 // pred_check
      _
    $region3: #{tpu_custom_call.1} parent=1 // pred_check_branch
      %12 = sbr.rel (0) target = $region5
    $region4: #{tpu_custom_call.1} parent=1 // pred_region
      %s14 = ssub.s32 64, 64
      %15 = vsyncadd [#allocation3], %s14
      %s17 = sshll.u32 [#allocation2], 4
      %s18 = int_to_ptr.vmem [resolvable:$true] %s17
      %20 = dma.hbm_to_vmem [thread:$0]  %s0, 64, %s18, [#allocation3]
    $region5: #{tpu_custom_call.1} parent=1 // pred_fallthru
      _
    // Predicated region
    $region6: #{tpu_custom_call.1} parent=1 // pred_check
      _
    $region7: #{tpu_custom_call.1} parent=1 // pred_check_branch
      %22 = sbr.rel (0) target = $region9
    $region8: #{tpu_custom_call.1} parent=1 // pred_region
      %s24 = ssub.s32 512, 512
      %25 = vsyncadd [#allocation6], %s24
      %s26 = sshll.u32 [#allocation5], 4
      %s27 = int_to_ptr.vmem [resolvable:$true] %s26
      %32 = dma.hbm_to_vmem [thread:$0]  %s1, 512, %s27, [#allocation6], 128, 128, 8
    $region9: #{tpu_custom_call.1} parent=1 // pred_fallthru
      _
    // Predicated region
    $region10: #{tpu_custom_call.1} parent=1 // pred_check
      _
    $region11: #{tpu_custom_call.1} parent=1 // pred_check_branch
      %34 = sbr.rel (0) target = $region13
    $region12: #{tpu_custom_call.1} parent=1 // pred_region
      _
    $region13: #{tpu_custom_call.1} parent=1 // pred_fallthru
      _
    // Predicated region
    $region14: #{tpu_custom_call.1} parent=1 // pred_check
      _
    $region15: #{tpu_custom_call.1} parent=1 // pred_check_branch
      %36 = sbr.rel (0) target = $region17
    $region16: #{tpu_custom_call.1} parent=1 // pred_region
      %37 = dma.done [#allocation3], 64
    $region17: #{tpu_custom_call.1} parent=1 // pred_fallthru
      _
    // Predicated region
    $region18: #{tpu_custom_call.1} parent=1 // pred_check
      _
    $region19: #{tpu_custom_call.1} parent=1 // pred_check_branch
      %39 = sbr.rel (0) target = $region21
    $region20: #{tpu_custom_call.1} parent=1 // pred_region
      %40 = dma.done [#allocation6], 512
    $region21: #{tpu_custom_call.1} parent=1 // pred_fallthru
      _
    %v42 = vld [vmem:[#allocation2] sm:$0xf]
    %v43 = vld [vmem:[#allocation5] sm:$0xff]
    %v44 = vld [vmem:[#allocation5 + $0x8] sm:$0xff]
    %v45 = vld [vmem:[#allocation5 + $0x10] sm:$0xff]
    %v46 = vld [vmem:[#allocation5 + $0x18] sm:$0xff]
    %v47 = vld [vmem:[%s2] sm:$0x3]
    %v49 = vlaneseq
    %v50 = vshrl.u32 %v49, 7
    %v51 = vsub.s32 0, %v50
    %v52 = vrot.slane %v47, %v51
    %v53 = vlaneseq
    %v54 = vshrl.u32 %v53, 7
    %v55 = vsub.s32 1, %v54
    %v56 = vrot.slane %v47, %v55
    %v63 = vunpack.c.l.b16 %v43
    %v64 = vunpack.c.h.b16 %v43
    %v65 = vunpack.c.l.b16 %v44
    %v66 = vunpack.c.h.b16 %v44
    %v67 = vunpack.c.l.b16 %v45
    %v68 = vunpack.c.h.b16 %v45
    %v69 = vunpack.c.l.b16 %v46
    %v70 = vunpack.c.h.b16 %v46
    %v71 = vpack.c.b16 %v65, %v63
    %v72 = vpack.c.b16 %v66, %v64
    %v73 = vpack.c.b16 %v69, %v67
    %v74 = vpack.c.b16 %v70, %v68
    %vm79 = vcmask 261120
    %v81 = vsel %vm79, %v42, 0
    %83 = vmatprep.subr.bf16.mxu0 %v72
    %84 = vmatpush1.bf16.msra.mxu0 %v71
    %85 = vmatprep.subr.bf16.mxu0 %v74
    %86 = vmatpush1.bf16.msra.mxu0 %v73
    %87 = vmatprep.subr.bf16.mxu0 0
    %88 = vmatpush1.bf16.msra.mxu0 0
    %89 = vmatprep.subr.bf16.mxu0 0
    %90 = vmatpush1.bf16.msra.mxu0 0
    %91 = vmatprep.subr.bf16.mxu0 0
    %92 = vmatpush1.bf16.msra.mxu0 0
    %93 = vmatprep.subr.bf16.mxu0 0
    %94 = vmatpush1.bf16.msra.mxu0 0
    %95 = vmatprep.subr.bf16.mxu0 0
    %96 = vmatpush1.bf16.msra.mxu0 0
    %97 = vmatprep.subr.bf16.mxu0 0
    %98 = vmatpush1.bf16.msra.mxu0 0
    %99 = vmatprep.subr.bf16.mxu0 0
    %100 = vmatpush1.bf16.msra.mxu0 0
    %101 = vmatprep.subr.bf16.mxu0 0
    %102 = vmatpush1.bf16.msra.mxu0 0
    %103 = vmatprep.subr.bf16.mxu0 0
    %104 = vmatpush1.bf16.msra.mxu0 0
    %105 = vmatprep.subr.bf16.mxu0 0
    %106 = vmatpush1.bf16.msra.mxu0 0
    %107 = vmatprep.subr.bf16.mxu0 0
    %108 = vmatpush1.bf16.msra.mxu0 0
    %109 = vmatprep.subr.bf16.mxu0 0
    %110 = vmatpush1.bf16.msra.mxu0 0
    %111 = vmatprep.subr.bf16.mxu0 0
    %112 = vmatpush1.bf16.msra.mxu0 0
    %113 = vmatprep.subr.bf16.mxu0 0
    %114 = vmatpush1.bf16.msra.mxu0 0
    %115 = vmatprep.mubr.bf16.mxu0 0
    %116 = vmatmul.mubr.bf16.gmra.mrb[0].mxu0 %v81
    %v117 = vpop.f32.mrb[0].mxu0
    %v118 = vadd.f32 %v52, %v117
    %v119 = vpop.f32.mrb[0].mxu0
    %v120 = vadd.f32 %v56, %v119
    %v121 = vpop.f32.mrb[0].mxu0
    %v122 = vpop.f32.mrb[0].mxu0
    %123 = vdwg.mxu0
    %v124 = vlaneseq
    %v125 = vand.u32 %v124, 127
    %v126 = vadd.s32 %v125, 128
    %vm127 = vcmp.lt.s32.totalorder %v125, 128
    %vm128 = vcmp.lt.s32.totalorder %v126, 128
    %v129 = vmul.f32 %v118, 1.442695
    %v130 = vpow.pop %v129
    %v131 = vmul.f32 %v120, 1.442695
    %v132 = vpow.pop %v131
    %v133 = vsel %vm127, %v118, %v130
    %v134 = vsel %vm128, %v120, %v132
    %135 = vst [vmem:[#allocation7] sm:$0xff] %v133
    %136 = vst [vmem:[#allocation7 + $0x8] sm:$0xff] %v134
    // Predicated region
    $region22: #{tpu_custom_call.1} parent=1 // pred_check
      _
    $region23: #{tpu_custom_call.1} parent=1 // pred_check_branch
      %138 = sbr.rel (0) target = $region25
    $region24: #{tpu_custom_call.1} parent=1 // pred_region
      %s140 = ssub.s32 256, 256
      %141 = vsyncadd [#allocation4], %s140
      %s143 = sshll.u32 [#allocation7], 4
      %s144 = int_to_ptr.vmem [resolvable:$true] %s143
      %146 = dma.vmem_to_hbm [thread:$0]  %s144, 256, %s3, [#allocation4]
    $region25: #{tpu_custom_call.1} parent=1 // pred_fallthru
      _
    // Predicated region
    $region26: #{tpu_custom_call.1} parent=1 // pred_check
      _
    $region27: #{tpu_custom_call.1} parent=1 // pred_check_branch
      %148 = sbr.rel (0) target = $region29
    $region28: #{tpu_custom_call.1} parent=1 // pred_region
      %149 = dma.done [#allocation4], 256
    $region29: #{tpu_custom_call.1} parent=1 // pred_fallthru
      _
    %150 = vsyncpa [#allocation3], 1
    %151 = vsyncpa [#allocation6], 1
    %152 = vsyncpa [#allocation4], 1

</llo_original>
